<compile_context>
chip_gen: v6e
topology: v6e:2x2x1
jax: 0.10.0
libtpu: 0.0.40
codegen_flags: <defaults>
</compile_context>

<pallas_src>
import math

import jax
import jax.numpy as jnp
from jax.experimental import pallas as pl
from jax.experimental.pallas import tpu as pltpu


def _pos_add_kernel(col_ref, row_ref, out_ref):
    # col_ref: (1, L_pad)  -- col_embed(arange(w)) flattened lane-dense (+pad)
    # row_ref: (h, L_pad)  -- row_embed(arange(h)) pre-tiled along lanes
    # out_ref: (h, L_pad)  -- out[y, x*F + f] = col[x, f] + row[y, f]
    col = col_ref[...].astype(jnp.float32)   # (1, L_pad), sublane-broadcast
    row = row_ref[...].astype(jnp.float32)   # (h, L_pad)
    out_ref[...] = (col + row).astype(out_ref.dtype)


def learned_positional_encoding_slab(col_weight, row_weight, w, h):
    """Returns the (h*w, num_feats) positional slab (no batch dim).

    col_weight: (col_num_embed, F), row_weight: (row_num_embed, F).
    out[y*w + x, f] = col_weight[x, f] + row_weight[y, f]
    """
    num_feats = col_weight.shape[1]
    L = w * num_feats
    # Lane-dense padding: make the flattened lane dim a multiple of 128 so the
    # kernel's loads/stores are full-width (no masked vst).
    L_pad = ((L + 127) // 128) * 128
    pad = L_pad - L

    # nn.Embedding(arange(n)) is just a leading-row slice of the weight table.
    col_flat = col_weight[:w].reshape(1, L)          # (1, w*F), lane-dense
    row_tiled = jnp.tile(row_weight[:h], (1, w))     # (h, w*F): [y, x*F+f]=row[y,f]
    if pad:
        col_flat = jnp.pad(col_flat, ((0, 0), (0, pad)))
        row_tiled = jnp.pad(row_tiled, ((0, 0), (0, pad)))

    out2d = pl.pallas_call(
        _pos_add_kernel,
        out_shape=jax.ShapeDtypeStruct((h, L_pad), col_weight.dtype),
    )(col_flat, row_tiled)

    if pad:
        out2d = out2d[:, :L]
    # (h, w*F) -> (h*w, F): contiguous, identical to pos.reshape in the module.
    return out2d.reshape(h * w, num_feats)


def learned_positional_encoding(col_weight, row_weight, batch, w, h):
    """Matches the PyTorch forward (add variant): returns (batch, h*w, F)."""
    pos = learned_positional_encoding_slab(col_weight, row_weight, w, h)
    # Batch replication outside the kernel; fuses into an XLA consumer.  A
    # downstream Pallas kernel should consume `pos` directly and broadcast via
    # its index_map instead of materializing this.
    return jnp.broadcast_to(pos[None], (batch, h * w, pos.shape[-1]))


def _xavier_uniform(key, shape, dtype=jnp.float32):
    fan_in, fan_out = shape[0], shape[1]
    a = math.sqrt(6.0 / (fan_in + fan_out))
    return jax.random.uniform(key, shape, dtype=dtype, minval=-a, maxval=a)


def reference(col_weight, row_weight, batch, w, h):
    x_emb = col_weight[:w]                                    # (w, F)
    y_emb = row_weight[:h]                                    # (h, F)
    pos = x_emb[None, :, :] + y_emb[:, None, :]               # (h, w, F)
    pos = jnp.broadcast_to(pos[None], (batch,) + pos.shape)   # (B, h, w, F)
    return pos.reshape(batch, -1, pos.shape[-1])


if __name__ == "__main__":
    # NOTE: this implements the *add* variant exactly as in the given forward
    # (the standard MMDetection LearnedPositionalEncoding concatenates x/y
    # embeddings to 2*F channels instead; the spec's forward adds them).
    num_feats = 32
    row_num_embed = 50
    col_num_embed = 50
    batch, w, h = 2, 16, 16

    key = jax.random.PRNGKey(0)
    k_row, k_col = jax.random.split(key)
    row_weight = _xavier_uniform(k_row, (row_num_embed, num_feats))
    col_weight = _xavier_uniform(k_col, (col_num_embed, num_feats))

    pos = learned_positional_encoding(col_weight, row_weight, batch, w, h)
    pos = jax.block_until_ready(pos)

    ref = reference(col_weight, row_weight, batch, w, h)
    assert pos.shape == (batch, h * w, num_feats), pos.shape
    assert jnp.allclose(pos, ref, atol=1e-6, rtol=1e-6)

    # Also exercise a non-lane-aligned shape to check the padding path.
    w2, h2 = 12, 9   # w2*F = 384 -> already /128, but h2 not /8; and 25*32=800 case:
    w3, h3 = 25, 10  # 25*32 = 800, not a multiple of 128 -> padded to 896
    for (ww, hh) in ((w2, h2), (w3, h3)):
        p = jax.block_until_ready(
            learned_positional_encoding(col_weight, row_weight, batch, ww, hh))
        r = reference(col_weight, row_weight, batch, ww, hh)
        assert jnp.allclose(p, r, atol=1e-6, rtol=1e-6)

    print("KERNEL_OK")
</pallas_src>

<mosaic_0001>
module attributes {stable_mosaic.version = 11 : i64} {
  func.func @_pos_add_kernel(%arg0: memref<1x512xf32, #tpu.memory_space<vmem>>, %arg1: memref<16x512xf32, #tpu.memory_space<vmem>>, %arg2: memref<16x512xf32, #tpu.memory_space<vmem>>) attributes {dimension_semantics = [], scalar_prefetch = 0 : i64, scratch_operands = 0 : i64, tpu.core_type = #tpu.core_type<tc>} {
    %c0 = arith.constant 0 : index
    %c0_0 = arith.constant 0 : index
    %0 = vector.load %arg0[%c0, %c0_0] : memref<1x512xf32, #tpu.memory_space<vmem>>, vector<1x512xf32>
    %c0_1 = arith.constant 0 : index
    %c0_2 = arith.constant 0 : index
    %1 = vector.load %arg1[%c0_1, %c0_2] : memref<16x512xf32, #tpu.memory_space<vmem>>, vector<16x512xf32>
    %2 = vector.broadcast %0 : vector<1x512xf32> to vector<16x512xf32>
    %3 = arith.addf %2, %1 : vector<16x512xf32>
    %c0_3 = arith.constant 0 : index
    %c0_4 = arith.constant 0 : index
    %4 = vector.load %arg2[%c0_3, %c0_4] : memref<16x512xf32, #tpu.memory_space<vmem>>, vector<16x512xf32>
    tpu.vector_store %arg2[%c0_3, %c0_4], %3 {strides = array<i32>} : memref<16x512xf32, #tpu.memory_space<vmem>>, vector<16x512xf32>,
    return
  }
}

</mosaic_0001>

<llo_original>
// kernel: tpu_custom_call.1
$region0: #{tpu_custom_call.1}
  #allocation0 [shape = 'u32[]', space=smem, size = 0x4, offset = 0x4, fixed_abs, tag = 'smem constant byte address 0x4 - core index']
  #allocation1 [shape = 'u32[144,128]{1,0:T(1,128)}', space=vmem, size = 0x12000, scoped, tag = 'internal scratch']
  %s0 = inlined_call_operand.hbm [shape: f32[1,512], index: 0, kind: input, shape index: {}]
  %s1 = inlined_call_operand.hbm [shape: f32[16,512], index: 1, kind: input, shape index: {}]
  %s2 = inlined_call_operand.hbm [shape: f32[16,512], index: 2, kind: output, shape index: {}]
  %s3 = sld [smem:[#allocation0]]
  $region26: #{tpu_custom_call.1} parent=0
    _
  %s5 = ssub.s32 1, %s3
  %s6 = scalar_select 0, %s5, %s3
  $region1: #{tpu_custom_call.1} parent=0
    #allocation2 [shape = 'u8[2048]{0}', space=vmem, size = 0x800, scoped, tag = 'input window, operand 0, single buffered']
    #allocation3 [shape = 's32[1]{0}', space=sflag, size = 0x4, scoped, tag = 'scoped memory for tpu_custom_call.1']
    #allocation4 [shape = 's32[1]{0}', space=sflag, size = 0x4, scoped, tag = 'scoped memory for tpu_custom_call.1']
    #allocation5 [shape = 'u8[32768]{0}', space=vmem, size = 0x8000, scoped, tag = 'input window, operand 1, single buffered']
    #allocation6 [shape = 's32[1]{0}', space=sflag, size = 0x4, scoped, tag = 'scoped memory for tpu_custom_call.1']
    #allocation7 [shape = 'u8[32768]{0}', space=vmem, size = 0x8000, scoped, tag = 'output window, operand 0, single buffered']
    %7 = vsyncpa [#allocation3], 0
    %8 = vsyncpa [#allocation6], 0
    %9 = vsyncpa [#allocation4], 0
    // Predicated region
    $region2: #{tpu_custom_call.1} parent=1 // pred_check
      _
    $region3: #{tpu_custom_call.1} parent=1 // pred_check_branch
      %11 = sbr.rel (0) target = $region5
    $region4: #{tpu_custom_call.1} parent=1 // pred_region
      %s13 = ssub.s32 64, 64
      %14 = vsyncadd [#allocation3], %s13
      %s16 = sshll.u32 [#allocation2], 4
      %s17 = int_to_ptr.vmem [resolvable:$true] %s16
      %19 = dma.hbm_to_vmem [thread:$0]  %s0, 64, %s17, [#allocation3]
    $region5: #{tpu_custom_call.1} parent=1 // pred_fallthru
      _
    // Predicated region
    $region6: #{tpu_custom_call.1} parent=1 // pred_check
      _
    $region7: #{tpu_custom_call.1} parent=1 // pred_check_branch
      %21 = sbr.rel (0) target = $region9
    $region8: #{tpu_custom_call.1} parent=1 // pred_region
      %s23 = ssub.s32 1024, 1024
      %24 = vsyncadd [#allocation6], %s23
      %s25 = sshll.u32 [#allocation5], 4
      %s26 = int_to_ptr.vmem [resolvable:$true] %s25
      %31 = dma.hbm_to_vmem [thread:$0]  %s1, 1024, %s26, [#allocation6], 512, 512, 32
    $region9: #{tpu_custom_call.1} parent=1 // pred_fallthru
      _
    // Predicated region
    $region10: #{tpu_custom_call.1} parent=1 // pred_check
      _
    $region11: #{tpu_custom_call.1} parent=1 // pred_check_branch
      %33 = sbr.rel (0) target = $region13
    $region12: #{tpu_custom_call.1} parent=1 // pred_region
      %34 = dma.done [#allocation3], 64
    $region13: #{tpu_custom_call.1} parent=1 // pred_fallthru
      _
    // Predicated region
    $region14: #{tpu_custom_call.1} parent=1 // pred_check
      _
    $region15: #{tpu_custom_call.1} parent=1 // pred_check_branch
      %36 = sbr.rel (0) target = $region17
    $region16: #{tpu_custom_call.1} parent=1 // pred_region
      %37 = dma.done [#allocation6], 1024
    $region17: #{tpu_custom_call.1} parent=1 // pred_fallthru
      _
    %v38 = vld [vmem:[#allocation2] sm:$0xf]
    %v39 = vld [vmem:[#allocation5] sm:$0xff]
    %v40 = vld [vmem:[#allocation5 + $0x8] sm:$0xff]
    %v41 = vld [vmem:[#allocation5 + $0x10] sm:$0xff]
    %v42 = vld [vmem:[#allocation5 + $0x18] sm:$0xff]
    %v43 = vld [vmem:[#allocation5 + $0x20] sm:$0xff]
    %v44 = vld [vmem:[#allocation5 + $0x28] sm:$0xff]
    %v45 = vld [vmem:[#allocation5 + $0x30] sm:$0xff]
    %v46 = vld [vmem:[#allocation5 + $0x38] sm:$0xff]
    %v48 = vlaneseq
    %v49 = vshrl.u32 %v48, 7
    %v50 = vsub.s32 0, %v49
    %v51 = vrot.slane %v38, %v50
    %v52 = vlaneseq
    %v53 = vshrl.u32 %v52, 7
    %v54 = vsub.s32 1, %v53
    %v55 = vrot.slane %v38, %v54
    %v56 = vlaneseq
    %v57 = vshrl.u32 %v56, 7
    %v58 = vsub.s32 2, %v57
    %v59 = vrot.slane %v38, %v58
    %v60 = vlaneseq
    %v61 = vshrl.u32 %v60, 7
    %v62 = vsub.s32 3, %v61
    %v63 = vrot.slane %v38, %v62
    %v68 = vadd.f32 %v51, %v39
    %v69 = vadd.f32 %v55, %v40
    %v70 = vadd.f32 %v59, %v41
    %v71 = vadd.f32 %v63, %v42
    %v72 = vadd.f32 %v51, %v43
    %v73 = vadd.f32 %v55, %v44
    %v74 = vadd.f32 %v59, %v45
    %v75 = vadd.f32 %v63, %v46
    %76 = vst [vmem:[#allocation7] sm:$0xff] %v68
    %77 = vst [vmem:[#allocation7 + $0x8] sm:$0xff] %v69
    %78 = vst [vmem:[#allocation7 + $0x10] sm:$0xff] %v70
    %79 = vst [vmem:[#allocation7 + $0x18] sm:$0xff] %v71
    %80 = vst [vmem:[#allocation7 + $0x20] sm:$0xff] %v72
    %81 = vst [vmem:[#allocation7 + $0x28] sm:$0xff] %v73
    %82 = vst [vmem:[#allocation7 + $0x30] sm:$0xff] %v74
    %83 = vst [vmem:[#allocation7 + $0x38] sm:$0xff] %v75
    // Predicated region
    $region18: #{tpu_custom_call.1} parent=1 // pred_check
      _
    $region19: #{tpu_custom_call.1} parent=1 // pred_check_branch
      %85 = sbr.rel (0) target = $region21
    $region20: #{tpu_custom_call.1} parent=1 // pred_region
      %s87 = ssub.s32 1024, 1024
      %88 = vsyncadd [#allocation4], %s87
      %s89 = sshll.u32 [#allocation7], 4
      %s90 = int_to_ptr.vmem [resolvable:$true] %s89
      %95 = dma.vmem_to_hbm [thread:$0]  %s90, 1024, %s2, [#allocation4], 512, 512, 32
    $region21: #{tpu_custom_call.1} parent=1 // pred_fallthru
      _
    // Predicated region
    $region22: #{tpu_custom_call.1} parent=1 // pred_check
      _
    $region23: #{tpu_custom_call.1} parent=1 // pred_check_branch
      %97 = sbr.rel (0) target = $region25
    $region24: #{tpu_custom_call.1} parent=1 // pred_region
      %98 = dma.done [#allocation4], 1024
    $region25: #{tpu_custom_call.1} parent=1 // pred_fallthru
      _
    %99 = vsyncpa [#allocation3], 1
    %100 = vsyncpa [#allocation6], 1
    %101 = vsyncpa [#allocation4], 1

</llo_original>
